<compile_context>
chip_gen: v6e
topology: v6e:2x2x1
jax: 0.10.0
libtpu: 0.0.40
codegen_flags: <defaults>
</compile_context>

<pallas_src>
from functools import partial

import jax
import jax.numpy as jnp
import numpy as np
from jax import lax
from jax.experimental import pallas as pl
from jax.experimental.pallas import tpu as pltpu

# ---------------------------------------------------------------------------
# Tiling policy
# ---------------------------------------------------------------------------
_TARGET_BLOCK_ELEMS = 256 * 1024       # ~1 MiB f32 per input block (HBM-roofline plateau)
_FUSED_MAX_BLOCK_ELEMS = 512 * 1024    # ~2 MiB f32: above this per-block group size -> chunked path
_MIN_GRID_STEPS = 8                    # aim for >=8 grid steps (DMA overlap + v7x's 2 TensorCores)


def _sublane_multiple(dtype):
    """dtype-aware second-minor tile multiple (f32: 8, bf16: 16, int8/fp8: 32)."""
    bits = jnp.dtype(dtype).itemsize * 8
    return {32: 8, 16: 16, 8: 32}.get(bits, 8)


def _vmem_limit_bytes():
    """Generation-aware scoped-VMEM limit with headroom for in/out double buffering
    and f32 upcast temporaries (v7x only has 64 MiB physical per TensorCore)."""
    try:
        cap = int(pltpu.get_tpu_info().vmem_capacity_bytes)
    except Exception:
        cap = 64 << 20
    return int(max(32 << 20, min(int(cap * 0.6), 64 << 20)))


def _compiler_params(semantics):
    return pltpu.CompilerParams(dimension_semantics=semantics,
                                vmem_limit_bytes=_vmem_limit_bytes())


def _pick_group_tile(groups, per_group_elems, dtype, target):
    """Tile along the independent-group axis (channels for BN, rows for LN/IN)."""
    sub = _sublane_multiple(dtype)
    if groups <= sub:
        return groups                                    # full axis (only legal choice)
    t = (target // max(per_group_elems, 1)) // sub * sub
    t = max(sub, min(t, groups))
    # Keep enough grid steps for pipelining and megacore sharding.
    max_steps = pl.cdiv(groups, sub)
    want = min(_MIN_GRID_STEPS, max_steps)
    if want > 1:
        cap = max(sub, pl.cdiv(groups, want) // sub * sub)
        t = min(t, cap)
    return t


def _pick_lane_chunk(length, rows_per_block, target):
    """Chunk size along the reduce/lane axis for the chunked (two-pass) path.
    Returns a multiple of 128 or the full length (both BlockSpec-legal)."""
    c = max(128, (target // max(rows_per_block, 1)) // 128 * 128)
    return min(c, length)
    # TODO(synk): if the lane axis itself is tiny (HW << 128) while N is huge,
    # additionally chunk the batch axis instead of relying on lane chunking.


# ---------------------------------------------------------------------------
# Shared affine folding:  y = (x - mean) * scale + shift
# ---------------------------------------------------------------------------
def _fold_scale_shift(inv_std, gamma, beta, r_m, r_v, *, eps, no_mean, no_var, affine):
    if affine:
        scale = inv_std * gamma
        shift = beta
    else:
        scale = inv_std
        shift = jnp.zeros_like(inv_std)
    if no_var:
        scale = scale * r_v
        shift = shift * r_v
    if no_mean:
        inv = 1.0 / (r_v + eps)
        scale = scale * r_v * inv
        shift = (shift * r_v + r_m) * inv
    return scale, shift


# ---------------------------------------------------------------------------
# BatchNorm kernels
# ---------------------------------------------------------------------------
def _bn_fused_kernel(x_ref, *refs, eps, momentum, no_mean, no_var, affine):
    """BN (training) over an (N, TC, HW) block: full reduce axis resident."""
    correction = no_mean or no_var
    idx = 0
    g = b = rm = rv = None
    if affine:
        g = refs[idx][...].astype(jnp.float32)
        b = refs[idx + 1][...].astype(jnp.float32)
        idx += 2
    if correction:
        rm = refs[idx][...].astype(jnp.float32)
        rv = refs[idx + 1][...].astype(jnp.float32)
        idx += 2
    o_ref, mean_ref, varu_ref = refs[idx], refs[idx + 1], refs[idx + 2]

    x = x_ref[...].astype(jnp.float32)                                  # (N, TC, HW)
    n, _, hw = x.shape
    m = n * hw
    inv_m = 1.0 / m

    # Two-pass (centered) variance: the block is VMEM-resident so the extra pass
    # is VPU-only and avoids E[x^2] - mean^2 cancellation.
    mean = jnp.sum(jnp.sum(x, axis=0), axis=-1, keepdims=True) * inv_m   # (TC, 1)
    d = x - mean
    var = jnp.sum(jnp.sum(d * d, axis=0), axis=-1, keepdims=True) * inv_m
    inv_std = lax.rsqrt(var + eps)

    corr = float(m) / float(m - 1) if m > 1 else 1.0
    var_u = var * corr                                                  # unbiased

    r_m_new = r_v_new = None
    if correction:
        r_m_new = (1.0 - momentum) * rm + momentum * mean               # updated stats
        r_v_new = (1.0 - momentum) * rv + momentum * var_u
    scale, shift = _fold_scale_shift(inv_std, g, b, r_m_new, r_v_new, eps=eps,
                                     no_mean=no_mean, no_var=no_var, affine=affine)

    o_ref[...] = (d * scale + shift).astype(o_ref.dtype)
    mean_ref[...] = mean
    varu_ref[...] = var_u


def _bn_stats_kernel(x_ref, *refs, eps, momentum, no_mean, no_var, affine,
                     n_batch, hw_total, maybe_partial):
    """Chunked per-channel stats: Chan-combined mean/M2 accumulators in VMEM,
    finalized into a folded per-channel affine at the last reduce chunk."""
    correction = no_mean or no_var
    idx = 0
    g_ref = b_ref = rm_ref = rv_ref = None
    if affine:
        g_ref, b_ref = refs[idx], refs[idx + 1]
        idx += 2
    if correction:
        rm_ref, rv_ref = refs[idx], refs[idx + 1]
        idx += 2
    mean_ref, varu_ref, scale_ref, shift_ref = refs[idx:idx + 4]
    mean_acc, m2_acc = refs[idx + 4], refs[idx + 5]

    hj = pl.program_id(1)
    x = x_ref[...].astype(jnp.float32)                                  # (N, TC, HWC)
    n, _, hwc = x.shape

    if maybe_partial:
        lane = lax.broadcasted_iota(jnp.int32, x.shape, 2)
        mask = (hj * hwc + lane) < hw_total
        n_b = jnp.minimum(hwc, hw_total - hj * hwc).astype(jnp.float32) * float(n)
        xm = jnp.where(mask, x, 0.0)
    else:
        mask = None
        n_b = float(n * hwc)
        xm = x

    s_b = jnp.sum(jnp.sum(xm, axis=0), axis=-1, keepdims=True)          # (TC, 1)
    mean_b = s_b / n_b
    d = x - mean_b
    if maybe_partial:
        d = jnp.where(mask, d, 0.0)
    m2_b = jnp.sum(jnp.sum(d * d, axis=0), axis=-1, keepdims=True)      # (TC, 1)

    @pl.when(hj == 0)
    def _():
        mean_acc[...] = mean_b
        m2_acc[...] = m2_b

    @pl.when(hj > 0)
    def _():
        n_a = hj.astype(jnp.float32) * float(n * hwc)                   # prior chunks are full
        n_ab = n_a + n_b
        delta = mean_b - mean_acc[...]
        mean_acc[...] = mean_acc[...] + delta * (n_b / n_ab)
        m2_acc[...] = m2_acc[...] + m2_b + (delta * delta) * (n_a * n_b / n_ab)

    @pl.when(hj == pl.num_programs(1) - 1)
    def _():
        m = n_batch * hw_total
        mean = mean_acc[...]
        var = m2_acc[...] * (1.0 / m)
        inv_std = lax.rsqrt(var + eps)
        corr = float(m) / float(m - 1) if m > 1 else 1.0
        var_u = var * corr
        g = g_ref[...].astype(jnp.float32) if affine else None
        b = b_ref[...].astype(jnp.float32) if affine else None
        r_m_new = r_v_new = None
        if correction:
            r_m_new = (1.0 - momentum) * rm_ref[...].astype(jnp.float32) + momentum * mean
            r_v_new = (1.0 - momentum) * rv_ref[...].astype(jnp.float32) + momentum * var_u
        scale, shift = _fold_scale_shift(inv_std, g, b, r_m_new, r_v_new, eps=eps,
                                         no_mean=no_mean, no_var=no_var, affine=affine)
        mean_ref[...] = mean
        varu_ref[...] = var_u
        scale_ref[...] = scale
        shift_ref[...] = shift


def _bn_apply_kernel(x_ref, mean_ref, scale_ref, shift_ref, o_ref):
    x = x_ref[...].astype(jnp.float32)
    o_ref[...] = ((x - mean_ref[...]) * scale_ref[...] + shift_ref[...]).astype(o_ref.dtype)


# ---------------------------------------------------------------------------
# Row-norm (LayerNorm / InstanceNorm view) kernels
# ---------------------------------------------------------------------------
def _row_fused_kernel(x_ref, *refs, eps, affine):
    if affine:
        g_ref, b_ref, o_ref = refs
    else:
        (o_ref,) = refs
    x = x_ref[...].astype(jnp.float32)                                  # (TR, M)
    inv_m = 1.0 / x.shape[-1]
    mean = jnp.sum(x, axis=-1, keepdims=True) * inv_m
    d = x - mean
    var = jnp.sum(d * d, axis=-1, keepdims=True) * inv_m
    y = d * lax.rsqrt(var + eps)
    if affine:
        y = y * g_ref[...].astype(jnp.float32) + b_ref[...].astype(jnp.float32)
    o_ref[...] = y.astype(o_ref.dtype)


def _row_stats_kernel(x_ref, mean_ref, rstd_ref, mean_acc, m2_acc, *,
                      eps, m_total, maybe_partial):
    mj = pl.program_id(1)
    x = x_ref[...].astype(jnp.float32)                                  # (TR, MC)
    mc = x.shape[-1]
    if maybe_partial:
        lane = lax.broadcasted_iota(jnp.int32, x.shape, 1)
        mask = (mj * mc + lane) < m_total
        n_b = jnp.minimum(mc, m_total - mj * mc).astype(jnp.float32)
        xm = jnp.where(mask, x, 0.0)
    else:
        mask = None
        n_b = float(mc)
        xm = x
    s_b = jnp.sum(xm, axis=-1, keepdims=True)                           # (TR, 1)
    mean_b = s_b / n_b
    d = x - mean_b
    if maybe_partial:
        d = jnp.where(mask, d, 0.0)
    m2_b = jnp.sum(d * d, axis=-1, keepdims=True)

    @pl.when(mj == 0)
    def _():
        mean_acc[...] = mean_b
        m2_acc[...] = m2_b

    @pl.when(mj > 0)
    def _():
        n_a = mj.astype(jnp.float32) * float(mc)
        n_ab = n_a + n_b
        delta = mean_b - mean_acc[...]
        mean_acc[...] = mean_acc[...] + delta * (n_b / n_ab)
        m2_acc[...] = m2_acc[...] + m2_b + (delta * delta) * (n_a * n_b / n_ab)

    @pl.when(mj == pl.num_programs(1) - 1)
    def _():
        var = m2_acc[...] * (1.0 / m_total)
        mean_ref[...] = mean_acc[...]
        rstd_ref[...] = lax.rsqrt(var + eps)


def _row_apply_kernel(x_ref, *refs, affine):
    if affine:
        mean_ref, rstd_ref, g_ref, b_ref, o_ref = refs
    else:
        mean_ref, rstd_ref, o_ref = refs
    x = x_ref[...].astype(jnp.float32)
    y = (x - mean_ref[...]) * rstd_ref[...]
    if affine:
        y = y * g_ref[...].astype(jnp.float32) + b_ref[...].astype(jnp.float32)
    o_ref[...] = y.astype(o_ref.dtype)


# ---------------------------------------------------------------------------
# Forward wrappers
# ---------------------------------------------------------------------------
def _bn_forward(x, weight, bias, running_mean, running_var, *, eps, momentum,
                no_mean, no_var, target_elems=None, fused_max_elems=None):
    target = target_elems or _TARGET_BLOCK_ELEMS
    fmax = fused_max_elems or _FUSED_MAX_BLOCK_ELEMS
    N, C, H, W = x.shape
    HW = H * W
    x3 = x.reshape(N, C, HW)                                            # free reshape
    correction = no_mean or no_var
    affine = not correction
    sub = _sublane_multiple(x.dtype)
    nbytes = x.size * x.dtype.itemsize
    # TODO(synk): for small-HW layers (HW = 49/196/784...), a one-off transpose to a
    # (C, N*H*W) layout would make stores lane-dense (largest measured lever).
    # TODO(synk): expose input_output_aliases={0: 0} for callers that donate x.

    fused = (N * HW) * min(C, sub) <= fmax
    if fused:
        TC = _pick_group_tile(C, N * HW, x.dtype, target)
        x_spec = pl.BlockSpec((N, TC, HW), lambda c: (0, c, 0))
        ch_spec = pl.BlockSpec((TC, 1), lambda c: (c, 0))
        operands, in_specs = [x3], [x_spec]
        if affine:
            operands += [weight.reshape(C, 1), bias.reshape(C, 1)]
            in_specs += [ch_spec, ch_spec]
        if correction:
            operands += [running_mean.reshape(C, 1).astype(jnp.float32),
                         running_var.reshape(C, 1).astype(jnp.float32)]
            in_specs += [ch_spec, ch_spec]
        kernel = partial(_bn_fused_kernel, eps=eps, momentum=momentum,
                         no_mean=no_mean, no_var=no_var, affine=affine)
        y, bmean, bvaru = pl.pallas_call(
            kernel,
            out_shape=(jax.ShapeDtypeStruct((N, C, HW), x.dtype),
                       jax.ShapeDtypeStruct((C, 1), jnp.float32),
                       jax.ShapeDtypeStruct((C, 1), jnp.float32)),
            grid=(pl.cdiv(C, TC),),
            in_specs=in_specs,
            out_specs=(x_spec, ch_spec, ch_spec),
            compiler_params=_compiler_params(("parallel",)),
            cost_estimate=pl.CostEstimate(flops=7 * x.size, transcendentals=C,
                                          bytes_accessed=2 * nbytes),
        )(*operands)
        return y.reshape(N, C, H, W), bmean.reshape(C), bvaru.reshape(C)

    # Chunked two-pass path: stats (reduce chunks, last grid axis, arbitrary) + apply.
    HWC = _pick_lane_chunk(HW, N * min(C, sub), target)
    TC = _pick_group_tile(C, N * HWC, x.dtype, target)
    n_chunks = pl.cdiv(HW, HWC)
    maybe_partial = (HW % HWC) != 0

    xg_spec = pl.BlockSpec((N, TC, HWC), lambda c, h: (0, c, h))
    chg_spec = pl.BlockSpec((TC, 1), lambda c, h: (c, 0))
    operands, in_specs = [x3], [xg_spec]
    if affine:
        operands += [weight.reshape(C, 1), bias.reshape(C, 1)]
        in_specs += [chg_spec, chg_spec]
    if correction:
        operands += [running_mean.reshape(C, 1).astype(jnp.float32),
                     running_var.reshape(C, 1).astype(jnp.float32)]
        in_specs += [chg_spec, chg_spec]
    stats_kernel = partial(_bn_stats_kernel, eps=eps, momentum=momentum,
                           no_mean=no_mean, no_var=no_var, affine=affine,
                           n_batch=N, hw_total=HW, maybe_partial=maybe_partial)
    bmean, bvaru, scale, shift = pl.pallas_call(
        stats_kernel,
        out_shape=tuple(jax.ShapeDtypeStruct((C, 1), jnp.float32) for _ in range(4)),
        grid=(pl.cdiv(C, TC), n_chunks),
        in_specs=in_specs,
        out_specs=tuple(chg_spec for _ in range(4)),
        scratch_shapes=[pltpu.VMEM((TC, 1), jnp.float32),
                        pltpu.VMEM((TC, 1), jnp.float32)],
        compiler_params=_compiler_params(("parallel", "arbitrary")),
        cost_estimate=pl.CostEstimate(flops=4 * x.size, transcendentals=C,
                                      bytes_accessed=nbytes),
    )(*operands)

    y = pl.pallas_call(
        _bn_apply_kernel,
        out_shape=jax.ShapeDtypeStruct((N, C, HW), x.dtype),
        grid=(pl.cdiv(C, TC), n_chunks),
        in_specs=[xg_spec, chg_spec, chg_spec, chg_spec],
        out_specs=xg_spec,
        compiler_params=_compiler_params(("parallel", "parallel")),
        cost_estimate=pl.CostEstimate(flops=3 * x.size, transcendentals=0,
                                      bytes_accessed=2 * nbytes),
    )(x3, bmean, scale, shift)
    return y.reshape(N, C, H, W), bmean.reshape(C), bvaru.reshape(C)


def _row_norm_forward(x2d, weight=None, bias=None, *, eps,
                      target_elems=None, fused_max_elems=None):
    target = target_elems or _TARGET_BLOCK_ELEMS
    fmax = fused_max_elems or _FUSED_MAX_BLOCK_ELEMS
    R, M = x2d.shape
    affine = weight is not None
    sub = _sublane_multiple(x2d.dtype)
    nbytes = x2d.size * x2d.dtype.itemsize

    fused = M * min(R, sub) <= fmax
    if fused:
        TR = _pick_group_tile(R, M, x2d.dtype, target)
        x_spec = pl.BlockSpec((TR, M), lambda i: (i, 0))
        operands, in_specs = [x2d], [x_spec]
        if affine:
            operands += [weight.reshape(1, M), bias.reshape(1, M)]
            in_specs += [pl.BlockSpec((1, M), lambda i: (0, 0))] * 2
        kernel = partial(_row_fused_kernel, eps=eps, affine=affine)
        return pl.pallas_call(
            kernel,
            out_shape=jax.ShapeDtypeStruct((R, M), x2d.dtype),
            grid=(pl.cdiv(R, TR),),
            in_specs=in_specs,
            out_specs=x_spec,
            compiler_params=_compiler_params(("parallel",)),
            cost_estimate=pl.CostEstimate(flops=7 * x2d.size, transcendentals=R,
                                          bytes_accessed=2 * nbytes),
        )(*operands)

    # Chunked path: reduce-axis chunks on the last ("arbitrary") grid axis.
    MC = _pick_lane_chunk(M, min(R, sub), target)
    TR = _pick_group_tile(R, MC, x2d.dtype, target)
    n_chunks = pl.cdiv(M, MC)
    maybe_partial = (M % MC) != 0

    x_spec = pl.BlockSpec((TR, MC), lambda i, j: (i, j))
    row_spec = pl.BlockSpec((TR, 1), lambda i, j: (i, 0))

    stats_kernel = partial(_row_stats_kernel, eps=eps, m_total=M,
                           maybe_partial=maybe_partial)
    mean, rstd = pl.pallas_call(
        stats_kernel,
        out_shape=(jax.ShapeDtypeStruct((R, 1), jnp.float32),
                   jax.ShapeDtypeStruct((R, 1), jnp.float32)),
        grid=(pl.cdiv(R, TR), n_chunks),
        in_specs=[x_spec],
        out_specs=(row_spec, row_spec),
        scratch_shapes=[pltpu.VMEM((TR, 1), jnp.float32),
                        pltpu.VMEM((TR, 1), jnp.float32)],
        compiler_params=_compiler_params(("parallel", "arbitrary")),
        cost_estimate=pl.CostEstimate(flops=4 * x2d.size, transcendentals=R,
                                      bytes_accessed=nbytes),
    )(x2d)

    operands, in_specs = [x2d, mean, rstd], [x_spec, row_spec, row_spec]
    if affine:
        # gamma/beta blocked along the reduce chunk (few hundred KiB per step, not
        # a resident multi-MiB (1, M) block).
        operands += [weight.reshape(1, M), bias.reshape(1, M)]
        in_specs += [pl.BlockSpec((1, MC), lambda i, j: (0, j))] * 2
    apply_kernel = partial(_row_apply_kernel, affine=affine)
    return pl.pallas_call(
        apply_kernel,
        out_shape=jax.ShapeDtypeStruct((R, M), x2d.dtype),
        grid=(pl.cdiv(R, TR), n_chunks),
        in_specs=in_specs,
        out_specs=x_spec,
        compiler_params=_compiler_params(("parallel", "parallel")),
        cost_estimate=pl.CostEstimate(flops=5 * x2d.size, transcendentals=0,
                                      bytes_accessed=2 * nbytes),
    )(*operands)


# ---------------------------------------------------------------------------
# Module wrapper
# ---------------------------------------------------------------------------
class NormLayerPallas:
    """JAX/Pallas port of NormLayer (training-mode forward)."""

    def __init__(self, input_size, norm_type='bn', no_mean=False, no_var=False,
                 key=None, target_block_elems=None, fused_max_block_elems=None):
        if key is None:
            key = jax.random.PRNGKey(0)
        self.input_size = tuple(input_size)               # (C, H, W)
        self.norm_type = norm_type
        self.no_mean = no_mean
        self.no_var = no_var
        self.eps = 1e-5
        self.momentum = 0.1
        self._target_elems = target_block_elems
        self._fused_max = fused_max_block_elems
        C = input_size[0]
        k = jax.random.split(key, 4)
        if norm_type == 'bn':
            affine = not (no_mean or no_var)
            self.weight = (jnp.ones((C,), jnp.float32)
                           + 0.1 * jax.random.normal(k[0], (C,))) if affine \
                          else jnp.ones((C,), jnp.float32)
            self.bias = (0.1 * jax.random.normal(k[1], (C,))) if affine \
                        else jnp.zeros((C,), jnp.float32)
            self.running_mean = 0.05 * jax.random.normal(k[2], (C,))
            self.running_var = 1.0 + 0.1 * jax.random.uniform(k[3], (C,))
        elif norm_type == 'ln':
            M = int(np.prod(self.input_size))
            self.weight = jnp.ones((M,), jnp.float32) + 0.1 * jax.random.normal(k[0], (M,))
            self.bias = 0.1 * jax.random.normal(k[1], (M,))
        # 'in': InstanceNorm2d defaults -> no affine params, no running stats.

    def __call__(self, x):
        N, C, H, W = x.shape
        if self.norm_type == 'bn':
            y, bmean, bvar_u = _bn_forward(
                x, self.weight, self.bias, self.running_mean, self.running_var,
                eps=self.eps, momentum=self.momentum,
                no_mean=self.no_mean, no_var=self.no_var,
                target_elems=self._target_elems, fused_max_elems=self._fused_max)
            mom = self.momentum
            self.running_mean = (1.0 - mom) * self.running_mean + mom * bmean
            self.running_var = (1.0 - mom) * self.running_var + mom * bvar_u
            return y
        elif self.norm_type == 'ln':
            M = C * H * W
            out = _row_norm_forward(x.reshape(N, M), self.weight, self.bias,
                                    eps=self.eps, target_elems=self._target_elems,
                                    fused_max_elems=self._fused_max)
            return out.reshape(N, C, H, W)
        elif self.norm_type == 'in':
            out = _row_norm_forward(x.reshape(N * C, H * W), eps=self.eps,
                                    target_elems=self._target_elems,
                                    fused_max_elems=self._fused_max)
            return out.reshape(N, C, H, W)
        return x  # norm_type not in {'bn','ln','in'} -> norm is None -> identity


# ---------------------------------------------------------------------------
# Pure-jnp reference (training mode, pre-update running stats)
# ---------------------------------------------------------------------------
def _ref_norm_layer(layer, x):
    eps, mom = layer.eps, layer.momentum
    if layer.norm_type == 'bn':
        mean = jnp.mean(x, axis=(0, 2, 3), keepdims=True)
        var = jnp.var(x, axis=(0, 2, 3), keepdims=True)
        y = (x - mean) / jnp.sqrt(var + eps)
        if not (layer.no_mean or layer.no_var):
            y = y * layer.weight.reshape(1, -1, 1, 1) + layer.bias.reshape(1, -1, 1, 1)
        else:
            n = x.shape[0] * x.shape[2] * x.shape[3]
            var_u = var * n / (n - 1)
            r_m = (1 - mom) * layer.running_mean.reshape(1, -1, 1, 1) + mom * mean
            r_v = (1 - mom) * layer.running_var.reshape(1, -1, 1, 1) + mom * var_u
            if layer.no_var:
                y = y * r_v
            if layer.no_mean:
                y = y * r_v + r_m
                y = y / (r_v + eps)
        return y
    if layer.norm_type == 'ln':
        mean = jnp.mean(x, axis=(1, 2, 3), keepdims=True)
        var = jnp.var(x, axis=(1, 2, 3), keepdims=True)
        y = (x - mean) / jnp.sqrt(var + eps)
        return (y * layer.weight.reshape(1, *layer.input_size)
                + layer.bias.reshape(1, *layer.input_size))
    if layer.norm_type == 'in':
        mean = jnp.mean(x, axis=(2, 3), keepdims=True)
        var = jnp.var(x, axis=(2, 3), keepdims=True)
        return (x - mean) / jnp.sqrt(var + eps)
    return x


if __name__ == "__main__":
    key = jax.random.PRNGKey(0)
    kx, kp = jax.random.split(key)

    force_chunked = dict(target_block_elems=1024, fused_max_block_elems=1024)
    cases = [
        # Fused (single-call) path.
        ((2, 4, 16, 16), dict(norm_type='bn'), {}),
        ((2, 4, 16, 16), dict(norm_type='bn', no_mean=True, no_var=True), {}),
        ((2, 4, 16, 16), dict(norm_type='ln'), {}),
        ((2, 4, 16, 16), dict(norm_type='in'), {}),
        # Chunked two-pass path (reduce-axis grid chunks, Chan combine, masked
        # partial last chunk: 17*17 is not a multiple of 128).
        ((2, 4, 17, 17), dict(norm_type='bn'), force_chunked),
        ((2, 4, 17, 17), dict(norm_type='bn', no_mean=True, no_var=True), force_chunked),
        ((2, 4, 17, 17), dict(norm_type='ln'), force_chunked),
        ((2, 4, 17, 17), dict(norm_type='in'), force_chunked),
    ]
    for shape, cfg, overrides in cases:
        N, C, H, W = shape
        x = jax.random.normal(kx, shape, dtype=jnp.float32)
        layer = NormLayerPallas((C, H, W), key=kp, **cfg, **overrides)
        ref = _ref_norm_layer(layer, x)            # before the call mutates stats
        out = jax.block_until_ready(layer(x))
        assert out.shape == x.shape and out.dtype == x.dtype
        np.testing.assert_allclose(np.asarray(out), np.asarray(ref),
                                   rtol=1e-4, atol=1e-4)
    print("KERNEL_OK")
</pallas_src>

<mosaic_0001>
module attributes {stable_mosaic.version = 11 : i64} {
  func.func @_bn_fused_kernel(%arg0: i32, %arg1: memref<2x4x256xf32, #tpu.memory_space<vmem>>, %arg2: memref<4x1xf32, #tpu.memory_space<vmem>>, %arg3: memref<4x1xf32, #tpu.memory_space<vmem>>, %arg4: memref<2x4x256xf32, #tpu.memory_space<vmem>>, %arg5: memref<4x1xf32, #tpu.memory_space<vmem>>, %arg6: memref<4x1xf32, #tpu.memory_space<vmem>>) attributes {dimension_semantics = [#tpu.dimension_semantics<parallel>], iteration_bounds = array<i64: 1>, scalar_prefetch = 0 : i64, scratch_operands = 0 : i64, tpu.core_type = #tpu.core_type<tc>, window_params = [{transform_indices = @transform_0, window_bounds = array<i64: 2, 4, 256>}, {transform_indices = @transform_1, window_bounds = array<i64: 4, 1>}, {transform_indices = @transform_2, window_bounds = array<i64: 4, 1>}, {transform_indices = @transform_3, window_bounds = array<i64: 2, 4, 256>}, {transform_indices = @transform_4, window_bounds = array<i64: 4, 1>}, {transform_indices = @transform_5, window_bounds = array<i64: 4, 1>}]} {
    %c0 = arith.constant 0 : index
    %c0_0 = arith.constant 0 : index
    %0 = vector.load %arg2[%c0, %c0_0] : memref<4x1xf32, #tpu.memory_space<vmem>>, vector<4x1xf32>
    %c0_1 = arith.constant 0 : index
    %c0_2 = arith.constant 0 : index
    %1 = vector.load %arg3[%c0_1, %c0_2] : memref<4x1xf32, #tpu.memory_space<vmem>>, vector<4x1xf32>
    %c0_3 = arith.constant 0 : index
    %c0_4 = arith.constant 0 : index
    %c0_5 = arith.constant 0 : index
    %2 = vector.load %arg1[%c0_3, %c0_4, %c0_5] : memref<2x4x256xf32, #tpu.memory_space<vmem>>, vector<2x4x256xf32>
    %cst = arith.constant dense<0.000000e+00> : vector<4x256xf32>
    %3 = vector.multi_reduction <add>, %2, %cst [0] : vector<2x4x256xf32> to vector<4x256xf32>
    %cst_6 = arith.constant dense<0.000000e+00> : vector<4xf32>
    %4 = vector.multi_reduction <add>, %3, %cst_6 [1] : vector<4x256xf32> to vector<4xf32>
    %5 = vector.shape_cast %4 : vector<4xf32> to vector<4x1xf32>
    %cst_7 = arith.constant 0.001953125 : f32
    %6 = vector.broadcast %cst_7 : f32 to vector<4x1xf32>
    %7 = arith.mulf %5, %6 : vector<4x1xf32>
    %8 = vector.shape_cast %7 : vector<4x1xf32> to vector<1x4x1xf32>
    %9 = vector.broadcast %8 : vector<1x4x1xf32> to vector<2x4x256xf32>
    %10 = arith.subf %2, %9 : vector<2x4x256xf32>
    %11 = arith.mulf %10, %10 : vector<2x4x256xf32>
    %cst_8 = arith.constant dense<0.000000e+00> : vector<4x256xf32>
    %12 = vector.multi_reduction <add>, %11, %cst_8 [0] : vector<2x4x256xf32> to vector<4x256xf32>
    %cst_9 = arith.constant dense<0.000000e+00> : vector<4xf32>
    %13 = vector.multi_reduction <add>, %12, %cst_9 [1] : vector<4x256xf32> to vector<4xf32>
    %14 = vector.shape_cast %13 : vector<4xf32> to vector<4x1xf32>
    %cst_10 = arith.constant 0.001953125 : f32
    %15 = vector.broadcast %cst_10 : f32 to vector<4x1xf32>
    %16 = arith.mulf %14, %15 : vector<4x1xf32>
    %cst_11 = arith.constant 9.99999974E-6 : f32
    %17 = vector.broadcast %cst_11 : f32 to vector<4x1xf32>
    %18 = arith.addf %16, %17 : vector<4x1xf32>
    %19 = math.rsqrt %18 : vector<4x1xf32>
    %cst_12 = arith.constant 1.00195694 : f32
    %20 = vector.broadcast %cst_12 : f32 to vector<4x1xf32>
    %21 = arith.mulf %16, %20 : vector<4x1xf32>
    %22 = arith.mulf %19, %0 : vector<4x1xf32>
    %23 = vector.shape_cast %22 : vector<4x1xf32> to vector<1x4x1xf32>
    %24 = vector.broadcast %23 : vector<1x4x1xf32> to vector<2x4x256xf32>
    %25 = arith.mulf %10, %24 : vector<2x4x256xf32>
    %26 = vector.shape_cast %1 : vector<4x1xf32> to vector<1x4x1xf32>
    %27 = vector.broadcast %26 : vector<1x4x1xf32> to vector<2x4x256xf32>
    %28 = arith.addf %25, %27 : vector<2x4x256xf32>
    %c0_13 = arith.constant 0 : index
    %c0_14 = arith.constant 0 : index
    %c0_15 = arith.constant 0 : index
    %29 = vector.load %arg4[%c0_13, %c0_14, %c0_15] : memref<2x4x256xf32, #tpu.memory_space<vmem>>, vector<2x4x256xf32>
    tpu.vector_store %arg4[%c0_13, %c0_14, %c0_15], %28 {strides = array<i32>} : memref<2x4x256xf32, #tpu.memory_space<vmem>>, vector<2x4x256xf32>,
    %c0_16 = arith.constant 0 : index
    %c0_17 = arith.constant 0 : index
    %30 = vector.load %arg5[%c0_16, %c0_17] : memref<4x1xf32, #tpu.memory_space<vmem>>, vector<4x1xf32>
    tpu.vector_store %arg5[%c0_16, %c0_17], %7 {strides = array<i32>} : memref<4x1xf32, #tpu.memory_space<vmem>>, vector<4x1xf32>,
    %c0_18 = arith.constant 0 : index
    %c0_19 = arith.constant 0 : index
    %31 = vector.load %arg6[%c0_18, %c0_19] : memref<4x1xf32, #tpu.memory_space<vmem>>, vector<4x1xf32>
    tpu.vector_store %arg6[%c0_18, %c0_19], %21 {strides = array<i32>} : memref<4x1xf32, #tpu.memory_space<vmem>>, vector<4x1xf32>,
    return
  }
  func.func @transform_0(%arg0: i32) -> (i32, i32, i32) {
    %c0_i32 = arith.constant 0 : i32
    %c0_i32_0 = arith.constant 0 : i32
    %c0_i32_1 = arith.constant 0 : i32
    return %c0_i32, %arg0, %c0_i32_0 : i32, i32, i32
  }
  func.func @transform_1(%arg0: i32) -> (i32, i32) {
    %c0_i32 = arith.constant 0 : i32
    %c0_i32_0 = arith.constant 0 : i32
    return %arg0, %c0_i32 : i32, i32
  }
  func.func @transform_2(%arg0: i32) -> (i32, i32) {
    %c0_i32 = arith.constant 0 : i32
    %c0_i32_0 = arith.constant 0 : i32
    return %arg0, %c0_i32 : i32, i32
  }
  func.func @transform_3(%arg0: i32) -> (i32, i32, i32) {
    %c0_i32 = arith.constant 0 : i32
    %c0_i32_0 = arith.constant 0 : i32
    %c0_i32_1 = arith.constant 0 : i32
    return %c0_i32, %arg0, %c0_i32_0 : i32, i32, i32
  }
  func.func @transform_4(%arg0: i32) -> (i32, i32) {
    %c0_i32 = arith.constant 0 : i32
    %c0_i32_0 = arith.constant 0 : i32
    return %arg0, %c0_i32 : i32, i32
  }
  func.func @transform_5(%arg0: i32) -> (i32, i32) {
    %c0_i32 = arith.constant 0 : i32
    %c0_i32_0 = arith.constant 0 : i32
    return %arg0, %c0_i32 : i32, i32
  }
}

</mosaic_0001>

<llo_original>
// kernel: tpu_custom_call.1
$region0: #{tpu_custom_call.1}
  #allocation0 [shape = 'u32[]', space=smem, size = 0x4, offset = 0x4, fixed_abs, tag = 'smem constant byte address 0x4 - core index']
  #allocation1 [shape = 'u32[144,128]{1,0:T(1,128)}', space=vmem, size = 0x12000, scoped, tag = 'internal scratch']
  %s0 = inlined_call_operand.hbm [shape: f32[2,4,256], index: 0, kind: input, shape index: {}]
  %s1 = inlined_call_operand.vmem [shape: f32[4,1], index: 1, kind: input, shape index: {}]
  %s2 = inlined_call_operand.vmem [shape: f32[4,1], index: 2, kind: input, shape index: {}]
  %s3 = inlined_call_operand.hbm [shape: f32[2,4,256], index: 3, kind: output, shape index: {0}]
  %s4 = inlined_call_operand.vmem [shape: f32[4,1], index: 4, kind: output, shape index: {1}]
  %s5 = inlined_call_operand.vmem [shape: f32[4,1], index: 5, kind: output, shape index: {2}]
  %6 = xla_tuple %s3, %s4, %s5
  %s7 = sld [smem:[#allocation0]]
  $region42: #{tpu_custom_call.1} parent=0
    _
  %s9 = ssub.s32 1, %s7
  %s10 = scalar_select 0, %s9, %s7
  $region1: #{tpu_custom_call.1} parent=0
    #allocation2 [shape = 'u8[8192]{0}', space=vmem, size = 0x2000, scoped, tag = 'input window, operand 0, single buffered']
    #allocation3 [shape = 's32[1]{0}', space=sflag, size = 0x4, scoped, tag = 'scoped memory for tpu_custom_call.1']
    #allocation4 [shape = 's32[1]{0}', space=sflag, size = 0x4, scoped, tag = 'scoped memory for tpu_custom_call.1']
    #allocation5 [shape = 'u8[8192]{0}', space=vmem, size = 0x2000, scoped, tag = 'output window, operand 0, single buffered']
    %11 = vsyncpa [#allocation3], 0
    %12 = vsyncpa [#allocation4], 0
    // Predicated region
    $region2: #{tpu_custom_call.1} parent=1 // pred_check
      _
    $region3: #{tpu_custom_call.1} parent=1 // pred_check_branch
      %14 = sbr.rel (0) target = $region5
    $region4: #{tpu_custom_call.1} parent=1 // pred_region
      %s16 = ssub.s32 256, 256
      %17 = vsyncadd [#allocation3], %s16
      %s18 = sshll.u32 [#allocation2], 4
      %s19 = int_to_ptr.vmem [resolvable:$true] %s18
      %24 = dma.hbm_to_vmem [thread:$0]  %s0, 256, %s19, [#allocation3], 128, 128, 8
    $region5: #{tpu_custom_call.1} parent=1 // pred_fallthru
      _
    // Predicated region
    $region6: #{tpu_custom_call.1} parent=1 // pred_check
      _
    $region7: #{tpu_custom_call.1} parent=1 // pred_check_branch
      %26 = sbr.rel (0) target = $region9
    $region8: #{tpu_custom_call.1} parent=1 // pred_region
      _
    $region9: #{tpu_custom_call.1} parent=1 // pred_fallthru
      _
    // Predicated region
    $region10: #{tpu_custom_call.1} parent=1 // pred_check
      _
    $region11: #{tpu_custom_call.1} parent=1 // pred_check_branch
      %28 = sbr.rel (0) target = $region13
    $region12: #{tpu_custom_call.1} parent=1 // pred_region
      _
    $region13: #{tpu_custom_call.1} parent=1 // pred_fallthru
      _
    // Predicated region
    $region14: #{tpu_custom_call.1} parent=1 // pred_check
      _
    $region15: #{tpu_custom_call.1} parent=1 // pred_check_branch
      %30 = sbr.rel (0) target = $region17
    $region16: #{tpu_custom_call.1} parent=1 // pred_region
      %31 = dma.done [#allocation3], 256
    $region17: #{tpu_custom_call.1} parent=1 // pred_fallthru
      _
    %v32 = vld [vmem:[%s1] sm:$0xf]
    %v33 = vld [vmem:[%s2] sm:$0xf]
    %v34 = vld [vmem:[#allocation2] sm:$0xff]
    %v35 = vld [vmem:[#allocation2 + $0x8] sm:$0xff]
    %v38 = vcombine.high %v34, %v34
    %v39 = vcombine.high %v35, %v35
    %vm42 = vcmask 1043456
    %v43 = vsel %vm42, %v34, 0.0
    %v44 = vsel %vm42, %v35, 0.0
    %v45 = vadd.f32 %v43, %v44
    %v46 = vsel %vm42, %v38, 0.0
    %v47 = vsel %vm42, %v39, 0.0
    %v48 = vadd.f32 %v46, %v47
    %v49 = vsel %vm42, %v45, 0.0
    %v50 = vsel %vm42, %v48, 0.0
    %v51 = vadd.f32 %v49, %v50
    %52 = vadd.xlane.f32.xlu0 %v51
    %v53 = vpop.xlane.xlu0 %52
    %v54 = vmul.f32 %v53, 0.001953125
    %v57 = vunpack.c.l.s4 839922192
    %v58 = vunpack.c.0.s8 %v57
    %v59 = vlaneseq
    %v60 = vshrl.u32 %v59, 7
    %v61 = vsub.s32 %v58, %v60
    %v62 = vrot.slane %v54, %v61
    %v64 = vsub.f32 %v34, %v62
    %v65 = vsub.f32 %v35, %v62
    %v66 = vmul.f32 %v64, %v64
    %v67 = vmul.f32 %v65, %v65
    %v70 = vcombine.high %v66, %v66
    %v71 = vcombine.high %v67, %v67
    %v74 = vsel %vm42, %v66, 0.0
    %v75 = vsel %vm42, %v67, 0.0
    %v76 = vadd.f32 %v74, %v75
    %v77 = vsel %vm42, %v70, 0.0
    %v78 = vsel %vm42, %v71, 0.0
    %v79 = vadd.f32 %v77, %v78
    %v80 = vsel %vm42, %v76, 0.0
    %v81 = vsel %vm42, %v79, 0.0
    %v82 = vadd.f32 %v80, %v81
    %83 = vadd.xlane.f32.xlu0 %v82
    %v84 = vpop.xlane.xlu0 %83
    %v85 = vmul.f32 %v84, 0.001953125
    %v86 = vadd.f32 %v85, 1e-05
    %v87 = vrsqrt.pop %v86
    %v88 = vmul.f32 %v85, 1.0019569
    %v89 = vmul.f32 %v87, %v32
    %91 = vset.pattern.permute.xlu0 0
    %92 = vperm.xlu0 %91, %v89
    %v93 = vpop.permute.xlu0 %92
    %v95 = vunpack.c.l.s4 839922192
    %v96 = vunpack.c.0.s8 %v95
    %v97 = vlaneseq
    %v98 = vshrl.u32 %v97, 7
    %v99 = vsub.s32 %v96, %v98
    %v100 = vrot.slane %v93, %v99
    %v102 = vmul.f32 %v64, %v100
    %v103 = vmul.f32 %v65, %v100
    %105 = vset.pattern.permute.xlu0 0
    %106 = vperm.xlu0 %105, %v33
    %v107 = vpop.permute.xlu0 %106
    %v109 = vunpack.c.l.s4 839922192
    %v110 = vunpack.c.0.s8 %v109
    %v111 = vlaneseq
    %v112 = vshrl.u32 %v111, 7
    %v113 = vsub.s32 %v110, %v112
    %v114 = vrot.slane %v107, %v113
    %v116 = vadd.f32 %v102, %v114
    %v117 = vadd.f32 %v103, %v114
    %118 = vst [vmem:[#allocation5] sm:$0xff] %v116
    %119 = vst [vmem:[#allocation5 + $0x8] sm:$0xff] %v117
    %vm120 = vcmask 3072
    %121 = vst.msk [vmem:[%s4] sm:$0xf] %vm120, %v54
    %122 = vst.msk [vmem:[%s5] sm:$0xf] %vm120, %v88
    // Predicated region
    $region18: #{tpu_custom_call.1} parent=1 // pred_check
      _
    $region19: #{tpu_custom_call.1} parent=1 // pred_check_branch
      %124 = sbr.rel (0) target = $region21
    $region20: #{tpu_custom_call.1} parent=1 // pred_region
      %s126 = ssub.s32 256, 256
      %127 = vsyncadd [#allocation4], %s126
      %s128 = sshll.u32 [#allocation5], 4
      %s129 = int_to_ptr.vmem [resolvable:$true] %s128
      %134 = dma.vmem_to_hbm [thread:$0]  %s129, 256, %s3, [#allocation4], 128, 128, 8
    $region21: #{tpu_custom_call.1} parent=1 // pred_fallthru
      _
    // Predicated region
    $region22: #{tpu_custom_call.1} parent=1 // pred_check
      _
    $region23: #{tpu_custom_call.1} parent=1 // pred_check_branch
      %136 = sbr.rel (0) target = $region25
    $region24: #{tpu_custom_call.1} parent=1 // pred_region
      _
    $region25: #{tpu_custom_call.1} parent=1 // pred_fallthru
      _
    // Predicated region
    $region26: #{tpu_custom_call.1} parent=1 // pred_check
      _
    $region27: #{tpu_custom_call.1} parent=1 // pred_check_branch
      %138 = sbr.rel (0) target = $region29
    $region28: #{tpu_custom_call.1} parent=1 // pred_region
      _
    $region29: #{tpu_custom_call.1} parent=1 // pred_fallthru
      _
    // Predicated region
    $region30: #{tpu_custom_call.1} parent=1 // pred_check
      _
    $region31: #{tpu_custom_call.1} parent=1 // pred_check_branch
      %140 = sbr.rel (0) target = $region33
    $region32: #{tpu_custom_call.1} parent=1 // pred_region
      %141 = dma.done [#allocation4], 256
    $region33: #{tpu_custom_call.1} parent=1 // pred_fallthru
      _
    // Predicated region
    $region34: #{tpu_custom_call.1} parent=1 // pred_check
      _
    $region35: #{tpu_custom_call.1} parent=1 // pred_check_branch
      %143 = sbr.rel (0) target = $region37
    $region36: #{tpu_custom_call.1} parent=1 // pred_region
      _
    $region37: #{tpu_custom_call.1} parent=1 // pred_fallthru
      _
    // Predicated region
    $region38: #{tpu_custom_call.1} parent=1 // pred_check
      _
    $region39: #{tpu_custom_call.1} parent=1 // pred_check_branch
      %145 = sbr.rel (0) target = $region41
    $region40: #{tpu_custom_call.1} parent=1 // pred_region
      _
    $region41: #{tpu_custom_call.1} parent=1 // pred_fallthru
      _
    %146 = vsyncpa [#allocation3], 1
    %147 = vsyncpa [#allocation4], 1

</llo_original>
